<compile_context>
chip_gen: v6e
topology: v6e:2x2x1
jax: 0.10.0
libtpu: 0.0.40
codegen_flags: <defaults>
</compile_context>

<pallas_src>
import math

import jax
import jax.numpy as jnp
from jax.experimental import pallas as pl
from jax.experimental.pallas import tpu as pltpu


def _round_up(x, m):
    return ((x + m - 1) // m) * m


def _cdiv(a, b):
    return -(-a // b)


def _vmem_budget_bytes():
    """Generation-aware VMEM budget: 75% of physical VMEM, with a v7x-safe
    fallback (48 MiB) if the hardware query is unavailable."""
    cap = 64 * 1024 * 1024
    try:
        cap = int(pltpu.get_tpu_info().vmem_capacity_bytes)
    except Exception:
        pass
    return int(cap * 3 // 4)


# ----------------------------------------------------------------------------
# Kernels.
# ----------------------------------------------------------------------------
def _combo_heads_resident_kernel(feat_ref, w_ref, b_ref, out_ref):
    """Full-K matmul per batch tile; the fused weight block has a constant
    index map, so it is DMA'd once and stays VMEM-resident."""
    out_ref[...] = (
        jnp.dot(feat_ref[...], w_ref[...], preferred_element_type=jnp.float32)
        + b_ref[...]
    )


def _combo_heads_ktiled_kernel(feat_ref, w_ref, b_ref, out_ref):
    """K-tiled path for large K.  The f32 output block is resident across the
    K ('arbitrary') axis, so accumulate into it directly; the bias initializes
    it at k==0 — no scratch accumulator, no finalize pass."""
    k_step = pl.program_id(1)

    @pl.when(k_step == 0)
    def _():
        out_ref[...] = jnp.broadcast_to(b_ref[...], out_ref.shape)

    out_ref[...] += jnp.dot(
        feat_ref[...], w_ref[...], preferred_element_type=jnp.float32
    )


# ----------------------------------------------------------------------------
# One-time (hoisted) head fusion.
# ----------------------------------------------------------------------------
def fuse_combo_head_params(w_reg, b_reg, w_cls, b_cls, *, dtype=jnp.float32):
    """Fuse the regression [K,1] and classification [K,C] heads into a single
    lane-dense, zero-padded [K,128] weight and [1,128] f32 bias.

    Call ONCE per model (hoisted out of the per-step forward) and reuse the
    result — this removes a weight-sized HBM pass from every forward call.
    """
    c = w_cls.shape[1]
    out_w = max(128, _round_up(1 + c, 128))
    w = jnp.concatenate([w_reg.astype(dtype), w_cls.astype(dtype)], axis=1)
    w = jnp.pad(w, ((0, 0), (0, out_w - (1 + c))))                 # [K, 128]
    b = jnp.concatenate(
        [b_reg.reshape(1, 1), b_cls.reshape(1, c)], axis=1
    ).astype(jnp.float32)
    b = jnp.pad(b, ((0, 0), (0, out_w - (1 + c))))                 # [1, 128]
    return w, b


# ----------------------------------------------------------------------------
# Forward.
# ----------------------------------------------------------------------------
def combo_net_forward(x_nchw, w_fused, b_fused, num_out, *, tn=256):
    """ComboNet.forward: backbone feature map -> (regression, classification).

    x_nchw  : [N, C, H, W] backbone feature map (f32 or bf16).
    w_fused : [num_ftrs, 128]  pre-fused, zero-padded head weight.
    b_fused : [1, 128]         pre-fused, zero-padded f32 bias.
    num_out : number of classification outputs.
    """
    n = x_nchw.shape[0]
    k = int(math.prod(x_nchw.shape[1:]))
    out_w = w_fused.shape[1]
    assert w_fused.shape[0] == k and b_fused.shape == (1, out_w)

    # Flatten exactly like feat.view(-1, num_flat_features(feat)); contiguous
    # NCHW so this is a no-copy reshape.  Keep the backbone's dtype.
    feat = x_nchw.reshape(n, k)
    feat_bytes = jnp.dtype(feat.dtype).itemsize
    w_bytes = jnp.dtype(w_fused.dtype).itemsize

    budget = _vmem_budget_bytes()

    # --- Batch tile: multiple of 8; guarantee >=2 tiles when N > 8 so the
    # 'parallel' axis can shard across both v7x TensorCores. ----------------
    tn = min(tn, _round_up(n, 8))
    if n > 8 and _cdiv(n, tn) < 2:
        tn = max(8, _round_up(_cdiv(n, 2), 8))

    # --- Decide weight residency (single full-K block) vs K-tiling. ---------
    def _resident_bytes(tn_):
        return (2 * k * out_w * w_bytes          # fused weight (counted 2x to be safe)
                + 2 * tn_ * k * feat_bytes       # double-buffered feat tile
                + 2 * tn_ * out_w * 4            # double-buffered f32 out tile
                + 2 * out_w * 4)                 # bias

    resident = _resident_bytes(tn) <= budget

    if not resident and n >= 1024:
        # Weight is re-streamed per batch tile; bigger TN amortizes it.
        tn = 512

    n_tiles = _cdiv(n, tn)
    n_pad = n_tiles * tn  # pad only the (tiny) OUTPUT, never the feat matrix.

    if resident:
        grid = (n_tiles,)
        out = pl.pallas_call(
            _combo_heads_resident_kernel,
            out_shape=jax.ShapeDtypeStruct((n_pad, out_w), jnp.float32),
            grid_spec=pltpu.PrefetchScalarGridSpec(
                num_scalar_prefetch=0,
                grid=grid,
                in_specs=[
                    pl.BlockSpec((tn, k), lambda i: (i, 0)),        # feat (full K)
                    pl.BlockSpec((k, out_w), lambda i: (0, 0)),     # resident weight
                    pl.BlockSpec((1, out_w), lambda i: (0, 0)),     # bias
                ],
                out_specs=pl.BlockSpec((tn, out_w), lambda i: (i, 0)),
            ),
            compiler_params=pltpu.CompilerParams(
                dimension_semantics=("parallel",),
                vmem_limit_bytes=budget,
            ),
        )(feat, w_fused, b_fused)
    else:
        # Pick the largest TK (<=4096) that divides K and fits the budget —
        # no feat padding along K, no OOB reads on the reduction axis.
        w = w_fused
        tk = None
        for cand in (4096, 2048, 1024, 512, 256, 128):
            if k % cand == 0:
                tile_bytes = (2 * tn * cand * feat_bytes
                              + 2 * cand * out_w * w_bytes
                              + 2 * tn * out_w * 4 + 2 * out_w * 4)
                if tile_bytes <= budget:
                    tk = cand
                    break
        if tk is None:
            # Rare (K has no convenient divisor): pad feat/weight along K.
            # This is the only case that pays an extra feat copy.
            tk = min(2048, _round_up(k, 128))
            k_padded = _round_up(k, tk)
            feat = jnp.pad(feat, ((0, 0), (0, k_padded - k)))
            w = jnp.pad(w_fused, ((0, k_padded - k), (0, 0)))
            k = k_padded

        grid = (n_tiles, k // tk)
        out = pl.pallas_call(
            _combo_heads_ktiled_kernel,
            out_shape=jax.ShapeDtypeStruct((n_pad, out_w), jnp.float32),
            grid_spec=pltpu.PrefetchScalarGridSpec(
                num_scalar_prefetch=0,
                grid=grid,
                in_specs=[
                    pl.BlockSpec((tn, tk), lambda i, kk: (i, kk)),     # feat
                    pl.BlockSpec((tk, out_w), lambda i, kk: (kk, 0)),  # fused W
                    pl.BlockSpec((1, out_w), lambda i, kk: (0, 0)),    # fused b
                ],
                out_specs=pl.BlockSpec((tn, out_w), lambda i, kk: (i, 0)),
            ),
            compiler_params=pltpu.CompilerParams(
                dimension_semantics=("parallel", "arbitrary"),
                vmem_limit_bytes=budget,
            ),
        )(feat, w, b_fused)

    # Slice the real heads back out of the fused/padded output.
    regression_output = out[:n, 0:1]
    classification_output = out[:n, 1:1 + num_out]
    return regression_output, classification_output


def init_linear_params(key, in_features, out_features):
    """nn.Linear-style init (uniform +/- 1/sqrt(fan_in)); weight returned
    transposed as [in_features, out_features]."""
    kw, kb = jax.random.split(key)
    bound = 1.0 / math.sqrt(in_features)
    w = jax.random.uniform(kw, (in_features, out_features), jnp.float32,
                           minval=-bound, maxval=bound)
    b = jax.random.uniform(kb, (out_features,), jnp.float32,
                           minval=-bound, maxval=bound)
    return w, b


if __name__ == "__main__":
    # Small shapes consistent with the module's forward: a backbone feature
    # map [N, C, H, W] flattened to [N, C*H*W].
    N, C, H, W = 2, 4, 16, 16          # num_ftrs = 1024
    NUM_OUT = 5

    key = jax.random.PRNGKey(0)
    k_x, k_reg, k_cls = jax.random.split(key, 3)

    x = jax.random.normal(k_x, (N, C, H, W), dtype=jnp.float32)
    num_ftrs = C * H * W

    w_reg, b_reg = init_linear_params(k_reg, num_ftrs, 1)        # regression_branch
    w_cls, b_cls = init_linear_params(k_cls, num_ftrs, NUM_OUT)  # classification_branch

    # Hoisted, once-per-model head fusion (perf review item 1).
    w_fused, b_fused = fuse_combo_head_params(w_reg, b_reg, w_cls, b_cls,
                                              dtype=x.dtype)

    reg_out, cls_out = combo_net_forward(x, w_fused, b_fused, NUM_OUT)
    jax.block_until_ready((reg_out, cls_out))

    # Pure-JAX reference check.
    feat_ref = x.reshape(N, num_ftrs)
    reg_ref = feat_ref @ w_reg + b_reg
    cls_ref = feat_ref @ w_cls + b_cls
    assert reg_out.shape == (N, 1) and cls_out.shape == (N, NUM_OUT)
    assert jnp.allclose(reg_out, reg_ref, atol=1e-4, rtol=1e-4)
    assert jnp.allclose(cls_out, cls_ref, atol=1e-4, rtol=1e-4)

    print("KERNEL_OK")
</pallas_src>

<mosaic_0001>
module attributes {stable_mosaic.version = 11 : i64} {
  func.func @_combo_heads_resident_kernel(%arg0: i32, %arg1: memref<8x1024xf32, #tpu.memory_space<vmem>>, %arg2: memref<1024x128xf32, #tpu.memory_space<vmem>>, %arg3: memref<1x128xf32, #tpu.memory_space<vmem>>, %arg4: memref<8x128xf32, #tpu.memory_space<vmem>>) attributes {dimension_semantics = [#tpu.dimension_semantics<parallel>], iteration_bounds = array<i64: 1>, scalar_prefetch = 0 : i64, scratch_operands = 0 : i64, tpu.core_type = #tpu.core_type<tc>, window_params = [{transform_indices = @transform_0, window_bounds = array<i64: 8, 1024>}, {pipeline_mode = #tpu.pipeline_mode<synchronous>, transform_indices = @transform_1, window_bounds = array<i64: 1024, 128>}, {pipeline_mode = #tpu.pipeline_mode<synchronous>, transform_indices = @transform_2, window_bounds = array<i64: 1, 128>}, {transform_indices = @transform_3, window_bounds = array<i64: 8, 128>}]} {
    %c0 = arith.constant 0 : index
    %c0_0 = arith.constant 0 : index
    %0 = vector.load %arg1[%c0, %c0_0] : memref<8x1024xf32, #tpu.memory_space<vmem>>, vector<8x1024xf32>
    %c0_1 = arith.constant 0 : index
    %c0_2 = arith.constant 0 : index
    %1 = vector.load %arg2[%c0_1, %c0_2] : memref<1024x128xf32, #tpu.memory_space<vmem>>, vector<1024x128xf32>
    %cst = arith.constant dense<0.000000e+00> : vector<8x128xf32>
    %2 = tpu.matmul %0, %1, %cst {dimension_numbers = #tpu.dot_dimension_numbers<[1], [0], [0], [1], [0, 0, 1, 1], [], []>} : vector<8x1024xf32>, vector<1024x128xf32>, vector<8x128xf32> -> vector<8x128xf32>
    %c0_3 = arith.constant 0 : index
    %c0_4 = arith.constant 0 : index
    %3 = vector.load %arg3[%c0_3, %c0_4] : memref<1x128xf32, #tpu.memory_space<vmem>>, vector<1x128xf32>
    %4 = vector.broadcast %3 : vector<1x128xf32> to vector<8x128xf32>
    %5 = arith.addf %2, %4 : vector<8x128xf32>
    %c0_5 = arith.constant 0 : index
    %c0_6 = arith.constant 0 : index
    %6 = vector.load %arg4[%c0_5, %c0_6] : memref<8x128xf32, #tpu.memory_space<vmem>>, vector<8x128xf32>
    tpu.vector_store %arg4[%c0_5, %c0_6], %5 {strides = array<i32>} : memref<8x128xf32, #tpu.memory_space<vmem>>, vector<8x128xf32>,
    return
  }
  func.func @transform_0(%arg0: i32) -> (i32, i32) {
    %c0_i32 = arith.constant 0 : i32
    %c0_i32_0 = arith.constant 0 : i32
    return %arg0, %c0_i32 : i32, i32
  }
  func.func @transform_1(%arg0: i32) -> (i32, i32) {
    %c0_i32 = arith.constant 0 : i32
    %c0_i32_0 = arith.constant 0 : i32
    %c0_i32_1 = arith.constant 0 : i32
    return %c0_i32, %c0_i32_0 : i32, i32
  }
  func.func @transform_2(%arg0: i32) -> (i32, i32) {
    %c0_i32 = arith.constant 0 : i32
    %c0_i32_0 = arith.constant 0 : i32
    %c0_i32_1 = arith.constant 0 : i32
    return %c0_i32, %c0_i32_0 : i32, i32
  }
  func.func @transform_3(%arg0: i32) -> (i32, i32) {
    %c0_i32 = arith.constant 0 : i32
    %c0_i32_0 = arith.constant 0 : i32
    return %arg0, %c0_i32 : i32, i32
  }
}

</mosaic_0001>

<llo_original>
// kernel: tpu_custom_call.1
$region0: #{tpu_custom_call.1}
  #allocation0 [shape = 'u32[]', space=smem, size = 0x4, offset = 0x4, fixed_abs, tag = 'smem constant byte address 0x4 - core index']
  #allocation1 [shape = 'u32[144,128]{1,0:T(1,128)}', space=vmem, size = 0x12000, scoped, tag = 'internal scratch']
  %s0 = inlined_call_operand.hbm [shape: f32[2,1024], index: 0, kind: input, shape index: {}]
  %s1 = inlined_call_operand.hbm [shape: f32[1024,128], index: 1, kind: input, shape index: {}]
  %s2 = inlined_call_operand.vmem [shape: f32[1,128], index: 2, kind: input, shape index: {}]
  %s3 = inlined_call_operand.hbm [shape: f32[8,128], index: 3, kind: output, shape index: {}]
  %s4 = sld [smem:[#allocation0]]
  $region30: #{tpu_custom_call.1} parent=0
    _
  %s6 = ssub.s32 1, %s4
  %s7 = scalar_select 0, %s6, %s4
  $region1: #{tpu_custom_call.1} parent=0
    #allocation2 [shape = 'u8[32768]{0}', space=vmem, size = 0x8000, scoped, tag = 'input window, operand 0, single buffered']
    #allocation3 [shape = 's32[1]{0}', space=sflag, size = 0x4, scoped, tag = 'scoped memory for tpu_custom_call.1']
    #allocation4 [shape = 's32[1]{0}', space=sflag, size = 0x4, scoped, tag = 'scoped memory for tpu_custom_call.1']
    #allocation5 [shape = 'u8[524288]{0}', space=vmem, size = 0x80000, scoped, tag = 'input window, operand 1, single buffered']
    #allocation6 [shape = 's32[1]{0}', space=sflag, size = 0x4, scoped, tag = 'scoped memory for tpu_custom_call.1']
    #allocation7 [shape = 'u8[4096]{0}', space=vmem, size = 0x1000, scoped, tag = 'output window, operand 0, single buffered']
    %8 = vsyncpa [#allocation3], 0
    %9 = vsyncpa [#allocation6], 0
    %10 = vsyncpa [#allocation4], 0
    // Predicated region
    $region2: #{tpu_custom_call.1} parent=1 // pred_check
      _
    $region3: #{tpu_custom_call.1} parent=1 // pred_check_branch
      %12 = sbr.rel (0) target = $region5
    $region4: #{tpu_custom_call.1} parent=1 // pred_region
      %s14 = ssub.s32 1024, 256
      %15 = vsyncadd [#allocation3], %s14
      %s16 = sshll.u32 [#allocation2], 4
      %s17 = int_to_ptr.vmem [resolvable:$true] %s16
      %22 = dma.hbm_to_vmem [thread:$0]  %s0, 256, %s17, [#allocation3], 256, 256, 16
    $region5: #{tpu_custom_call.1} parent=1 // pred_fallthru
      _
    // Predicated region
    $region6: #{tpu_custom_call.1} parent=1 // pred_check
      _
    $region7: #{tpu_custom_call.1} parent=1 // pred_check_branch
      %24 = sbr.rel (0) target = $region9
    $region8: #{tpu_custom_call.1} parent=1 // pred_region
      %s26 = ssub.s32 16384, 16384
      %27 = vsyncadd [#allocation6], %s26
      %s28 = sshll.u32 [#allocation5], 4
      %s29 = int_to_ptr.vmem [resolvable:$true] %s28
      %34 = dma.hbm_to_vmem [thread:$0]  %s1, 16384, %s29, [#allocation6], 128, 128, 8
    $region9: #{tpu_custom_call.1} parent=1 // pred_fallthru
      _
    // Predicated region
    $region10: #{tpu_custom_call.1} parent=1 // pred_check
      _
    $region11: #{tpu_custom_call.1} parent=1 // pred_check_branch
      %36 = sbr.rel (0) target = $region13
    $region12: #{tpu_custom_call.1} parent=1 // pred_region
      _
    $region13: #{tpu_custom_call.1} parent=1 // pred_fallthru
      _
    // Predicated region
    $region14: #{tpu_custom_call.1} parent=1 // pred_check
      _
    $region15: #{tpu_custom_call.1} parent=1 // pred_check_branch
      %38 = sbr.rel (0) target = $region17
    $region16: #{tpu_custom_call.1} parent=1 // pred_region
      %39 = dma.done [#allocation3], 1024
    $region17: #{tpu_custom_call.1} parent=1 // pred_fallthru
      _
    // Predicated region
    $region18: #{tpu_custom_call.1} parent=1 // pred_check
      _
    $region19: #{tpu_custom_call.1} parent=1 // pred_check_branch
      %41 = sbr.rel (0) target = $region21
    $region20: #{tpu_custom_call.1} parent=1 // pred_region
      %42 = dma.done [#allocation6], 16384
    $region21: #{tpu_custom_call.1} parent=1 // pred_fallthru
      _
    %v43 = vld [vmem:[#allocation2] sm:$0xff]
    %v44 = vld [vmem:[#allocation2 + $0x8] sm:$0xff]
    %v45 = vld [vmem:[#allocation2 + $0x10] sm:$0xff]
    %v46 = vld [vmem:[#allocation2 + $0x18] sm:$0xff]
    %v47 = vld [vmem:[#allocation2 + $0x20] sm:$0xff]
    %v48 = vld [vmem:[#allocation2 + $0x28] sm:$0xff]
    %v49 = vld [vmem:[#allocation2 + $0x30] sm:$0xff]
    %v50 = vld [vmem:[#allocation2 + $0x38] sm:$0xff]
    %v51 = vld [vmem:[#allocation5] sm:$0xff]
    %v52 = vld [vmem:[#allocation5 + $0x8] sm:$0xff]
    %v53 = vld [vmem:[#allocation5 + $0x10] sm:$0xff]
    %v54 = vld [vmem:[#allocation5 + $0x18] sm:$0xff]
    %v55 = vld [vmem:[#allocation5 + $0x20] sm:$0xff]
    %v56 = vld [vmem:[#allocation5 + $0x28] sm:$0xff]
    %v57 = vld [vmem:[#allocation5 + $0x30] sm:$0xff]
    %v58 = vld [vmem:[#allocation5 + $0x38] sm:$0xff]
    %v59 = vld [vmem:[#allocation5 + $0x40] sm:$0xff]
    %v60 = vld [vmem:[#allocation5 + $0x48] sm:$0xff]
    %v61 = vld [vmem:[#allocation5 + $0x50] sm:$0xff]
    %v62 = vld [vmem:[#allocation5 + $0x58] sm:$0xff]
    %v63 = vld [vmem:[#allocation5 + $0x60] sm:$0xff]
    %v64 = vld [vmem:[#allocation5 + $0x68] sm:$0xff]
    %v65 = vld [vmem:[#allocation5 + $0x70] sm:$0xff]
    %v66 = vld [vmem:[#allocation5 + $0x78] sm:$0xff]
    %v67 = vld [vmem:[#allocation5 + $0x80] sm:$0xff]
    %v68 = vld [vmem:[#allocation5 + $0x88] sm:$0xff]
    %v69 = vld [vmem:[#allocation5 + $0x90] sm:$0xff]
    %v70 = vld [vmem:[#allocation5 + $0x98] sm:$0xff]
    %v71 = vld [vmem:[#allocation5 + $0xa0] sm:$0xff]
    %v72 = vld [vmem:[#allocation5 + $0xa8] sm:$0xff]
    %v73 = vld [vmem:[#allocation5 + $0xb0] sm:$0xff]
    %v74 = vld [vmem:[#allocation5 + $0xb8] sm:$0xff]
    %v75 = vld [vmem:[#allocation5 + $0xc0] sm:$0xff]
    %v76 = vld [vmem:[#allocation5 + $0xc8] sm:$0xff]
    %v77 = vld [vmem:[#allocation5 + $0xd0] sm:$0xff]
    %v78 = vld [vmem:[#allocation5 + $0xd8] sm:$0xff]
    %v79 = vld [vmem:[#allocation5 + $0xe0] sm:$0xff]
    %v80 = vld [vmem:[#allocation5 + $0xe8] sm:$0xff]
    %v81 = vld [vmem:[#allocation5 + $0xf0] sm:$0xff]
    %v82 = vld [vmem:[#allocation5 + $0xf8] sm:$0xff]
    %v83 = vld [vmem:[#allocation5 + $0x100] sm:$0xff]
    %v84 = vld [vmem:[#allocation5 + $0x108] sm:$0xff]
    %v85 = vld [vmem:[#allocation5 + $0x110] sm:$0xff]
    %v86 = vld [vmem:[#allocation5 + $0x118] sm:$0xff]
    %v87 = vld [vmem:[#allocation5 + $0x120] sm:$0xff]
    %v88 = vld [vmem:[#allocation5 + $0x128] sm:$0xff]
    %v89 = vld [vmem:[#allocation5 + $0x130] sm:$0xff]
    %v90 = vld [vmem:[#allocation5 + $0x138] sm:$0xff]
    %v91 = vld [vmem:[#allocation5 + $0x140] sm:$0xff]
    %v92 = vld [vmem:[#allocation5 + $0x148] sm:$0xff]
    %v93 = vld [vmem:[#allocation5 + $0x150] sm:$0xff]
    %v94 = vld [vmem:[#allocation5 + $0x158] sm:$0xff]
    %v95 = vld [vmem:[#allocation5 + $0x160] sm:$0xff]
    %v96 = vld [vmem:[#allocation5 + $0x168] sm:$0xff]
    %v97 = vld [vmem:[#allocation5 + $0x170] sm:$0xff]
    %v98 = vld [vmem:[#allocation5 + $0x178] sm:$0xff]
    %v99 = vld [vmem:[#allocation5 + $0x180] sm:$0xff]
    %v100 = vld [vmem:[#allocation5 + $0x188] sm:$0xff]
    %v101 = vld [vmem:[#allocation5 + $0x190] sm:$0xff]
    %v102 = vld [vmem:[#allocation5 + $0x198] sm:$0xff]
    %v103 = vld [vmem:[#allocation5 + $0x1a0] sm:$0xff]
    %v104 = vld [vmem:[#allocation5 + $0x1a8] sm:$0xff]
    %v105 = vld [vmem:[#allocation5 + $0x1b0] sm:$0xff]
    %v106 = vld [vmem:[#allocation5 + $0x1b8] sm:$0xff]
    %v107 = vld [vmem:[#allocation5 + $0x1c0] sm:$0xff]
    %v108 = vld [vmem:[#allocation5 + $0x1c8] sm:$0xff]
    %v109 = vld [vmem:[#allocation5 + $0x1d0] sm:$0xff]
    %v110 = vld [vmem:[#allocation5 + $0x1d8] sm:$0xff]
    %v111 = vld [vmem:[#allocation5 + $0x1e0] sm:$0xff]
    %v112 = vld [vmem:[#allocation5 + $0x1e8] sm:$0xff]
    %v113 = vld [vmem:[#allocation5 + $0x1f0] sm:$0xff]
    %v114 = vld [vmem:[#allocation5 + $0x1f8] sm:$0xff]
    %v115 = vld [vmem:[#allocation5 + $0x200] sm:$0xff]
    %v116 = vld [vmem:[#allocation5 + $0x208] sm:$0xff]
    %v117 = vld [vmem:[#allocation5 + $0x210] sm:$0xff]
    %v118 = vld [vmem:[#allocation5 + $0x218] sm:$0xff]
    %v119 = vld [vmem:[#allocation5 + $0x220] sm:$0xff]
    %v120 = vld [vmem:[#allocation5 + $0x228] sm:$0xff]
    %v121 = vld [vmem:[#allocation5 + $0x230] sm:$0xff]
    %v122 = vld [vmem:[#allocation5 + $0x238] sm:$0xff]
    %v123 = vld [vmem:[#allocation5 + $0x240] sm:$0xff]
    %v124 = vld [vmem:[#allocation5 + $0x248] sm:$0xff]
    %v125 = vld [vmem:[#allocation5 + $0x250] sm:$0xff]
    %v126 = vld [vmem:[#allocation5 + $0x258] sm:$0xff]
    %v127 = vld [vmem:[#allocation5 + $0x260] sm:$0xff]
    %v128 = vld [vmem:[#allocation5 + $0x268] sm:$0xff]
    %v129 = vld [vmem:[#allocation5 + $0x270] sm:$0xff]
    %v130 = vld [vmem:[#allocation5 + $0x278] sm:$0xff]
    %v131 = vld [vmem:[#allocation5 + $0x280] sm:$0xff]
    %v132 = vld [vmem:[#allocation5 + $0x288] sm:$0xff]
    %v133 = vld [vmem:[#allocation5 + $0x290] sm:$0xff]
    %v134 = vld [vmem:[#allocation5 + $0x298] sm:$0xff]
    %v135 = vld [vmem:[#allocation5 + $0x2a0] sm:$0xff]
    %v136 = vld [vmem:[#allocation5 + $0x2a8] sm:$0xff]
    %v137 = vld [vmem:[#allocation5 + $0x2b0] sm:$0xff]
    %v138 = vld [vmem:[#allocation5 + $0x2b8] sm:$0xff]
    %v139 = vld [vmem:[#allocation5 + $0x2c0] sm:$0xff]
    %v140 = vld [vmem:[#allocation5 + $0x2c8] sm:$0xff]
    %v141 = vld [vmem:[#allocation5 + $0x2d0] sm:$0xff]
    %v142 = vld [vmem:[#allocation5 + $0x2d8] sm:$0xff]
    %v143 = vld [vmem:[#allocation5 + $0x2e0] sm:$0xff]
    %v144 = vld [vmem:[#allocation5 + $0x2e8] sm:$0xff]
    %v145 = vld [vmem:[#allocation5 + $0x2f0] sm:$0xff]
    %v146 = vld [vmem:[#allocation5 + $0x2f8] sm:$0xff]
    %v147 = vld [vmem:[#allocation5 + $0x300] sm:$0xff]
    %v148 = vld [vmem:[#allocation5 + $0x308] sm:$0xff]
    %v149 = vld [vmem:[#allocation5 + $0x310] sm:$0xff]
    %v150 = vld [vmem:[#allocation5 + $0x318] sm:$0xff]
    %v151 = vld [vmem:[#allocation5 + $0x320] sm:$0xff]
    %v152 = vld [vmem:[#allocation5 + $0x328] sm:$0xff]
    %v153 = vld [vmem:[#allocation5 + $0x330] sm:$0xff]
    %v154 = vld [vmem:[#allocation5 + $0x338] sm:$0xff]
    %v155 = vld [vmem:[#allocation5 + $0x340] sm:$0xff]
    %v156 = vld [vmem:[#allocation5 + $0x348] sm:$0xff]
    %v157 = vld [vmem:[#allocation5 + $0x350] sm:$0xff]
    %v158 = vld [vmem:[#allocation5 + $0x358] sm:$0xff]
    %v159 = vld [vmem:[#allocation5 + $0x360] sm:$0xff]
    %v160 = vld [vmem:[#allocation5 + $0x368] sm:$0xff]
    %v161 = vld [vmem:[#allocation5 + $0x370] sm:$0xff]
    %v162 = vld [vmem:[#allocation5 + $0x378] sm:$0xff]
    %v163 = vld [vmem:[#allocation5 + $0x380] sm:$0xff]
    %v164 = vld [vmem:[#allocation5 + $0x388] sm:$0xff]
    %v165 = vld [vmem:[#allocation5 + $0x390] sm:$0xff]
    %v166 = vld [vmem:[#allocation5 + $0x398] sm:$0xff]
    %v167 = vld [vmem:[#allocation5 + $0x3a0] sm:$0xff]
    %v168 = vld [vmem:[#allocation5 + $0x3a8] sm:$0xff]
    %v169 = vld [vmem:[#allocation5 + $0x3b0] sm:$0xff]
    %v170 = vld [vmem:[#allocation5 + $0x3b8] sm:$0xff]
    %v171 = vld [vmem:[#allocation5 + $0x3c0] sm:$0xff]
    %v172 = vld [vmem:[#allocation5 + $0x3c8] sm:$0xff]
    %v173 = vld [vmem:[#allocation5 + $0x3d0] sm:$0xff]
    %v174 = vld [vmem:[#allocation5 + $0x3d8] sm:$0xff]
    %v175 = vld [vmem:[#allocation5 + $0x3e0] sm:$0xff]
    %v176 = vld [vmem:[#allocation5 + $0x3e8] sm:$0xff]
    %v177 = vld [vmem:[#allocation5 + $0x3f0] sm:$0xff]
    %v178 = vld [vmem:[#allocation5 + $0x3f8] sm:$0xff]
    %v179 = vld [vmem:[%s2] sm:$0x1]
    %v181 = vlaneseq
    %v182 = vshrl.u32 %v181, 7
    %v183 = vsub.s32 0, %v182
    %v184 = vrot.slane %v179, %v183
    %v194 = vcombine.low %v43, %v45
    %v195 = vcombine.high %v43, %v45
    %v196 = vcombine.low %v47, %v49
    %v197 = vcombine.high %v47, %v49
    %v199 = vunpack.c.l.s4 1983009808
    %v200 = vunpack.c.0.s8 %v199
    %v201 = vlaneseq
    %v202 = vshrl.u32 %v201, 7
    %v203 = vsub.s32 %v200, %v202
    %v204 = vrot.slane %v194, %v203
    %v206 = vunpack.c.l.s4 1983009808
    %v207 = vunpack.c.0.s8 %v206
    %v208 = vlaneseq
    %v209 = vshrl.u32 %v208, 7
    %v210 = vsub.s32 %v207, %v209
    %v211 = vrot.slane %v195, %v210
    %v213 = vunpack.c.l.s4 1983009808
    %v214 = vunpack.c.0.s8 %v213
    %v215 = vlaneseq
    %v216 = vshrl.u32 %v215, 7
    %v217 = vsub.s32 %v214, %v216
    %v218 = vrot.slane %v196, %v217
    %v220 = vunpack.c.l.s4 1983009808
    %v221 = vunpack.c.0.s8 %v220
    %v222 = vlaneseq
    %v223 = vshrl.u32 %v222, 7
    %v224 = vsub.s32 %v221, %v223
    %v225 = vrot.slane %v197, %v224
    %v226 = vcombine.low %v204, %v218
    %v227 = vcombine.high %v204, %v218
    %v228 = vcombine.low %v211, %v225
    %v229 = vcombine.high %v211, %v225
    %v230 = vcombine.low %v44, %v46
    %v231 = vcombine.high %v44, %v46
    %v232 = vcombine.low %v48, %v50
    %v233 = vcombine.high %v48, %v50
    %v235 = vunpack.c.l.s4 1983009808
    %v236 = vunpack.c.0.s8 %v235
    %v237 = vlaneseq
    %v238 = vshrl.u32 %v237, 7
    %v239 = vsub.s32 %v236, %v238
    %v240 = vrot.slane %v230, %v239
    %v242 = vunpack.c.l.s4 1983009808
    %v243 = vunpack.c.0.s8 %v242
    %v244 = vlaneseq
    %v245 = vshrl.u32 %v244, 7
    %v246 = vsub.s32 %v243, %v245
    %v247 = vrot.slane %v231, %v246
    %v249 = vunpack.c.l.s4 1983009808
    %v250 = vunpack.c.0.s8 %v249
    %v251 = vlaneseq
    %v252 = vshrl.u32 %v251, 7
    %v253 = vsub.s32 %v250, %v252
    %v254 = vrot.slane %v232, %v253
    %v256 = vunpack.c.l.s4 1983009808
    %v257 = vunpack.c.0.s8 %v256
    %v258 = vlaneseq
    %v259 = vshrl.u32 %v258, 7
    %v260 = vsub.s32 %v257, %v259
    %v261 = vrot.slane %v233, %v260
    %v262 = vcombine.low %v240, %v254
    %v263 = vcombine.high %v240, %v254
    %v264 = vcombine.low %v247, %v261
    %v265 = vcombine.high %v247, %v261
    %274 = vmatprep.subr.mxu0 0.0
    %275 = vmatpush1.msra.mxu0 %v66
    %276 = vmatprep.subr.mxu0 0.0
    %277 = vmatpush1.msra.mxu0 %v65
    %278 = vmatprep.subr.mxu0 0.0
    %279 = vmatpush1.msra.mxu0 %v64
    %280 = vmatprep.subr.mxu0 0.0
    %281 = vmatpush1.msra.mxu0 %v63
    %282 = vmatprep.subr.mxu0 0.0
    %283 = vmatpush1.msra.mxu0 %v62
    %284 = vmatprep.subr.mxu0 0.0
    %285 = vmatpush1.msra.mxu0 %v61
    %286 = vmatprep.subr.mxu0 0.0
    %287 = vmatpush1.msra.mxu0 %v60
    %288 = vmatprep.subr.mxu0 0.0
    %289 = vmatpush1.msra.mxu0 %v59
    %290 = vmatprep.subr.mxu0 0.0
    %291 = vmatpush1.msra.mxu0 %v58
    %292 = vmatprep.subr.mxu0 0.0
    %293 = vmatpush1.msra.mxu0 %v57
    %294 = vmatprep.subr.mxu0 0.0
    %295 = vmatpush1.msra.mxu0 %v56
    %296 = vmatprep.subr.mxu0 0.0
    %297 = vmatpush1.msra.mxu0 %v55
    %298 = vmatprep.subr.mxu0 0.0
    %299 = vmatpush1.msra.mxu0 %v54
    %300 = vmatprep.subr.mxu0 0.0
    %301 = vmatpush1.msra.mxu0 %v53
    %302 = vmatprep.subr.mxu0 0.0
    %303 = vmatpush1.msra.mxu0 %v52
    %304 = vmatprep.subr.mxu0 0.0
    %305 = vmatpush1.msra.mxu0 %v51
    %306 = vmatprep.subr.mxu0 0.0
    %307 = vmatpush2.msra.mxu0 %v82
    %308 = vmatprep.subr.mxu0 0.0
    %309 = vmatpush2.msra.mxu0 %v81
    %310 = vmatprep.subr.mxu0 0.0
    %311 = vmatpush2.msra.mxu0 %v80
    %312 = vmatprep.subr.mxu0 0.0
    %313 = vmatpush2.msra.mxu0 %v79
    %314 = vmatprep.subr.mxu0 0.0
    %315 = vmatpush2.msra.mxu0 %v78
    %316 = vmatprep.subr.mxu0 0.0
    %317 = vmatpush2.msra.mxu0 %v77
    %318 = vmatprep.subr.mxu0 0.0
    %319 = vmatpush2.msra.mxu0 %v76
    %320 = vmatprep.subr.mxu0 0.0
    %321 = vmatpush2.msra.mxu0 %v75
    %322 = vmatprep.subr.mxu0 0.0
    %323 = vmatpush2.msra.mxu0 %v74
    %324 = vmatprep.subr.mxu0 0.0
    %325 = vmatpush2.msra.mxu0 %v73
    %326 = vmatprep.subr.mxu0 0.0
    %327 = vmatpush2.msra.mxu0 %v72
    %328 = vmatprep.subr.mxu0 0.0
    %329 = vmatpush2.msra.mxu0 %v71
    %330 = vmatprep.subr.mxu0 0.0
    %331 = vmatpush2.msra.mxu0 %v70
    %332 = vmatprep.subr.mxu0 0.0
    %333 = vmatpush2.msra.mxu0 %v69
    %334 = vmatprep.subr.mxu0 0.0
    %335 = vmatpush2.msra.mxu0 %v68
    %336 = vmatprep.subr.mxu0 0.0
    %337 = vmatpush2.msra.mxu0 %v67
    %338 = vmatprep.mubr.f32.mxu0 %v227
    %339 = vmatmul.mubr.f32.gmra.mxu0 %v226
    %v340 = vpop.f32.mrf.mxu0
    %v341 = vadd.f32 %v184, %v340
    %v342 = vpop.f32.mrf.mxu0
    %343 = vdwg.mxu0
    %344 = vmatprep.subr.mxu0 0.0
    %345 = vmatpush1.msra.mxu0 %v98
    %346 = vmatprep.subr.mxu0 0.0
    %347 = vmatpush1.msra.mxu0 %v97
    %348 = vmatprep.subr.mxu0 0.0
    %349 = vmatpush1.msra.mxu0 %v96
    %350 = vmatprep.subr.mxu0 0.0
    %351 = vmatpush1.msra.mxu0 %v95
    %352 = vmatprep.subr.mxu0 0.0
    %353 = vmatpush1.msra.mxu0 %v94
    %354 = vmatprep.subr.mxu0 0.0
    %355 = vmatpush1.msra.mxu0 %v93
    %356 = vmatprep.subr.mxu0 0.0
    %357 = vmatpush1.msra.mxu0 %v92
    %358 = vmatprep.subr.mxu0 0.0
    %359 = vmatpush1.msra.mxu0 %v91
    %360 = vmatprep.subr.mxu0 0.0
    %361 = vmatpush1.msra.mxu0 %v90
    %362 = vmatprep.subr.mxu0 0.0
    %363 = vmatpush1.msra.mxu0 %v89
    %364 = vmatprep.subr.mxu0 0.0
    %365 = vmatpush1.msra.mxu0 %v88
    %366 = vmatprep.subr.mxu0 0.0
    %367 = vmatpush1.msra.mxu0 %v87
    %368 = vmatprep.subr.mxu0 0.0
    %369 = vmatpush1.msra.mxu0 %v86
    %370 = vmatprep.subr.mxu0 0.0
    %371 = vmatpush1.msra.mxu0 %v85
    %372 = vmatprep.subr.mxu0 0.0
    %373 = vmatpush1.msra.mxu0 %v84
    %374 = vmatprep.subr.mxu0 0.0
    %375 = vmatpush1.msra.mxu0 %v83
    %376 = vmatprep.subr.mxu0 0.0
    %377 = vmatpush2.msra.mxu0 %v114
    %378 = vmatprep.subr.mxu0 0.0
    %379 = vmatpush2.msra.mxu0 %v113
    %380 = vmatprep.subr.mxu0 0.0
    %381 = vmatpush2.msra.mxu0 %v112
    %382 = vmatprep.subr.mxu0 0.0
    %383 = vmatpush2.msra.mxu0 %v111
    %384 = vmatprep.subr.mxu0 0.0
    %385 = vmatpush2.msra.mxu0 %v110
    %386 = vmatprep.subr.mxu0 0.0
    %387 = vmatpush2.msra.mxu0 %v109
    %388 = vmatprep.subr.mxu0 0.0
    %389 = vmatpush2.msra.mxu0 %v108
    %390 = vmatprep.subr.mxu0 0.0
    %391 = vmatpush2.msra.mxu0 %v107
    %392 = vmatprep.subr.mxu0 0.0
    %393 = vmatpush2.msra.mxu0 %v106
    %394 = vmatprep.subr.mxu0 0.0
    %395 = vmatpush2.msra.mxu0 %v105
    %396 = vmatprep.subr.mxu0 0.0
    %397 = vmatpush2.msra.mxu0 %v104
    %398 = vmatprep.subr.mxu0 0.0
    %399 = vmatpush2.msra.mxu0 %v103
    %400 = vmatprep.subr.mxu0 0.0
    %401 = vmatpush2.msra.mxu0 %v102
    %402 = vmatprep.subr.mxu0 0.0
    %403 = vmatpush2.msra.mxu0 %v101
    %404 = vmatprep.subr.mxu0 0.0
    %405 = vmatpush2.msra.mxu0 %v100
    %406 = vmatprep.subr.mxu0 0.0
    %407 = vmatpush2.msra.mxu0 %v99
    %408 = vmatprep.mubr.f32.mxu0 %v229
    %409 = vmatmul.mubr.f32.gmra.mxu0 %v228
    %v410 = vpop.f32.mrf.mxu0
    %v411 = vadd.f32 %v341, %v410
    %v412 = vpop.f32.mrf.mxu0
    %413 = vdwg.mxu0
    %414 = vmatprep.subr.mxu0 0.0
    %415 = vmatpush1.msra.mxu0 %v130
    %416 = vmatprep.subr.mxu0 0.0
    %417 = vmatpush1.msra.mxu0 %v129
    %418 = vmatprep.subr.mxu0 0.0
    %419 = vmatpush1.msra.mxu0 %v128
    %420 = vmatprep.subr.mxu0 0.0
    %421 = vmatpush1.msra.mxu0 %v127
    %422 = vmatprep.subr.mxu0 0.0
    %423 = vmatpush1.msra.mxu0 %v126
    %424 = vmatprep.subr.mxu0 0.0
    %425 = vmatpush1.msra.mxu0 %v125
    %426 = vmatprep.subr.mxu0 0.0
    %427 = vmatpush1.msra.mxu0 %v124
    %428 = vmatprep.subr.mxu0 0.0
    %429 = vmatpush1.msra.mxu0 %v123
    %430 = vmatprep.subr.mxu0 0.0
    %431 = vmatpush1.msra.mxu0 %v122
    %432 = vmatprep.subr.mxu0 0.0
    %433 = vmatpush1.msra.mxu0 %v121
    %434 = vmatprep.subr.mxu0 0.0
    %435 = vmatpush1.msra.mxu0 %v120
    %436 = vmatprep.subr.mxu0 0.0
    %437 = vmatpush1.msra.mxu0 %v119
    %438 = vmatprep.subr.mxu0 0.0
    %439 = vmatpush1.msra.mxu0 %v118
    %440 = vmatprep.subr.mxu0 0.0
    %441 = vmatpush1.msra.mxu0 %v117
    %442 = vmatprep.subr.mxu0 0.0
    %443 = vmatpush1.msra.mxu0 %v116
    %444 = vmatprep.subr.mxu0 0.0
    %445 = vmatpush1.msra.mxu0 %v115
    %446 = vmatprep.subr.mxu0 0.0
    %447 = vmatpush2.msra.mxu0 %v146
    %448 = vmatprep.subr.mxu0 0.0
    %449 = vmatpush2.msra.mxu0 %v145
    %450 = vmatprep.subr.mxu0 0.0
    %451 = vmatpush2.msra.mxu0 %v144
    %452 = vmatprep.subr.mxu0 0.0
    %453 = vmatpush2.msra.mxu0 %v143
    %454 = vmatprep.subr.mxu0 0.0
    %455 = vmatpush2.msra.mxu0 %v142
    %456 = vmatprep.subr.mxu0 0.0
    %457 = vmatpush2.msra.mxu0 %v141
    %458 = vmatprep.subr.mxu0 0.0
    %459 = vmatpush2.msra.mxu0 %v140
    %460 = vmatprep.subr.mxu0 0.0
    %461 = vmatpush2.msra.mxu0 %v139
    %462 = vmatprep.subr.mxu0 0.0
    %463 = vmatpush2.msra.mxu0 %v138
    %464 = vmatprep.subr.mxu0 0.0
    %465 = vmatpush2.msra.mxu0 %v137
    %466 = vmatprep.subr.mxu0 0.0
    %467 = vmatpush2.msra.mxu0 %v136
    %468 = vmatprep.subr.mxu0 0.0
    %469 = vmatpush2.msra.mxu0 %v135
    %470 = vmatprep.subr.mxu0 0.0
    %471 = vmatpush2.msra.mxu0 %v134
    %472 = vmatprep.subr.mxu0 0.0
    %473 = vmatpush2.msra.mxu0 %v133
    %474 = vmatprep.subr.mxu0 0.0
    %475 = vmatpush2.msra.mxu0 %v132
    %476 = vmatprep.subr.mxu0 0.0
    %477 = vmatpush2.msra.mxu0 %v131
    %478 = vmatprep.mubr.f32.mxu0 %v263
    %479 = vmatmul.mubr.f32.gmra.mxu0 %v262
    %v480 = vpop.f32.mrf.mxu0
    %v481 = vadd.f32 %v411, %v480
    %v482 = vpop.f32.mrf.mxu0
    %483 = vdwg.mxu0
    %484 = vmatprep.subr.mxu0 0.0
    %485 = vmatpush1.msra.mxu0 %v162
    %486 = vmatprep.subr.mxu0 0.0
    %487 = vmatpush1.msra.mxu0 %v161
    %488 = vmatprep.subr.mxu0 0.0
    %489 = vmatpush1.msra.mxu0 %v160
    %490 = vmatprep.subr.mxu0 0.0
    %491 = vmatpush1.msra.mxu0 %v159
    %492 = vmatprep.subr.mxu0 0.0
    %493 = vmatpush1.msra.mxu0 %v158
    %494 = vmatprep.subr.mxu0 0.0
    %495 = vmatpush1.msra.mxu0 %v157
    %496 = vmatprep.subr.mxu0 0.0
    %497 = vmatpush1.msra.mxu0 %v156
    %498 = vmatprep.subr.mxu0 0.0
    %499 = vmatpush1.msra.mxu0 %v155
    %500 = vmatprep.subr.mxu0 0.0
    %501 = vmatpush1.msra.mxu0 %v154
    %502 = vmatprep.subr.mxu0 0.0
    %503 = vmatpush1.msra.mxu0 %v153
    %504 = vmatprep.subr.mxu0 0.0
    %505 = vmatpush1.msra.mxu0 %v152
    %506 = vmatprep.subr.mxu0 0.0
    %507 = vmatpush1.msra.mxu0 %v151
    %508 = vmatprep.subr.mxu0 0.0
    %509 = vmatpush1.msra.mxu0 %v150
    %510 = vmatprep.subr.mxu0 0.0
    %511 = vmatpush1.msra.mxu0 %v149
    %512 = vmatprep.subr.mxu0 0.0
    %513 = vmatpush1.msra.mxu0 %v148
    %514 = vmatprep.subr.mxu0 0.0
    %515 = vmatpush1.msra.mxu0 %v147
    %516 = vmatprep.subr.mxu0 0.0
    %517 = vmatpush2.msra.mxu0 %v178
    %518 = vmatprep.subr.mxu0 0.0
    %519 = vmatpush2.msra.mxu0 %v177
    %520 = vmatprep.subr.mxu0 0.0
    %521 = vmatpush2.msra.mxu0 %v176
    %522 = vmatprep.subr.mxu0 0.0
    %523 = vmatpush2.msra.mxu0 %v175
    %524 = vmatprep.subr.mxu0 0.0
    %525 = vmatpush2.msra.mxu0 %v174
    %526 = vmatprep.subr.mxu0 0.0
    %527 = vmatpush2.msra.mxu0 %v173
    %528 = vmatprep.subr.mxu0 0.0
    %529 = vmatpush2.msra.mxu0 %v172
    %530 = vmatprep.subr.mxu0 0.0
    %531 = vmatpush2.msra.mxu0 %v171
    %532 = vmatprep.subr.mxu0 0.0
    %533 = vmatpush2.msra.mxu0 %v170
    %534 = vmatprep.subr.mxu0 0.0
    %535 = vmatpush2.msra.mxu0 %v169
    %536 = vmatprep.subr.mxu0 0.0
    %537 = vmatpush2.msra.mxu0 %v168
    %538 = vmatprep.subr.mxu0 0.0
    %539 = vmatpush2.msra.mxu0 %v167
    %540 = vmatprep.subr.mxu0 0.0
    %541 = vmatpush2.msra.mxu0 %v166
    %542 = vmatprep.subr.mxu0 0.0
    %543 = vmatpush2.msra.mxu0 %v165
    %544 = vmatprep.subr.mxu0 0.0
    %545 = vmatpush2.msra.mxu0 %v164
    %546 = vmatprep.subr.mxu0 0.0
    %547 = vmatpush2.msra.mxu0 %v163
    %548 = vmatprep.mubr.f32.mxu0 %v265
    %549 = vmatmul.mubr.f32.gmra.mxu0 %v264
    %v550 = vpop.f32.mrf.mxu0
    %v551 = vadd.f32 %v481, %v550
    %v552 = vpop.f32.mrf.mxu0
    %553 = vdwg.mxu0
    %554 = vst [vmem:[#allocation7] sm:$0xff] %v551
    // Predicated region
    $region22: #{tpu_custom_call.1} parent=1 // pred_check
      _
    $region23: #{tpu_custom_call.1} parent=1 // pred_check_branch
      %556 = sbr.rel (0) target = $region25
    $region24: #{tpu_custom_call.1} parent=1 // pred_region
      %s558 = ssub.s32 128, 128
      %559 = vsyncadd [#allocation4], %s558
      %s561 = sshll.u32 [#allocation7], 4
      %s562 = int_to_ptr.vmem [resolvable:$true] %s561
      %564 = dma.vmem_to_hbm [thread:$0]  %s562, 128, %s3, [#allocation4]
    $region25: #{tpu_custom_call.1} parent=1 // pred_fallthru
      _
    // Predicated region
    $region26: #{tpu_custom_call.1} parent=1 // pred_check
      _
    $region27: #{tpu_custom_call.1} parent=1 // pred_check_branch
      %566 = sbr.rel (0) target = $region29
    $region28: #{tpu_custom_call.1} parent=1 // pred_region
      %567 = dma.done [#allocation4], 128
    $region29: #{tpu_custom_call.1} parent=1 // pred_fallthru
      _
    %568 = vsyncpa [#allocation3], 1
    %569 = vsyncpa [#allocation6], 1
    %570 = vsyncpa [#allocation4], 1

</llo_original>
